<compile_context>
chip_gen: v7x
topology: tpu7x:2x2x1
jax: 0.10.0
libtpu: 0.0.40
codegen_flags: <defaults>
</compile_context>

<pallas_src>
import functools

import jax
import jax.numpy as jnp
from jax.experimental import pallas as pl
from jax.experimental.pallas import tpu as pltpu

_SQRT_HALF = 0.7071067811865476
_SQRT_2_OVER_PI = 0.7978845608028654


def _gelu_f32(h, approximate):
    if approximate:
        # tanh formulation: transcendental goes to the EUP slot (frees VALU on
        # v6e/v7x for narrow models).  Numerics differ slightly from exact erf.
        inner = jnp.float32(_SQRT_2_OVER_PI) * (h + jnp.float32(0.044715) * h * h * h)
        return 0.5 * h * (1.0 + jnp.tanh(inner))
    # Exact erf GELU (matches torch.nn.GELU default).
    return 0.5 * h * (1.0 + jax.lax.erf(h * jnp.float32(_SQRT_HALF)))


def _fc1_gelu_fc2(x_ref, w1_ref, b1_ref, w2_ref, approximate):
    """One hidden-chunk partial of GELU(x @ W1 + b1) @ W2, f32 result."""
    h = jnp.dot(x_ref[...], w1_ref[...], preferred_element_type=jnp.float32)
    h = h + b1_ref[...].astype(jnp.float32)  # (1, th) broadcasts over rows
    h = _gelu_f32(h, approximate)
    return jnp.dot(
        h.astype(w2_ref.dtype), w2_ref[...], preferred_element_type=jnp.float32
    )


def _ffn_kernel_acc(x_ref, w1_ref, b1_ref, w2_ref, b2_ref, o_ref, acc_ref, *,
                    approximate):
    """Non-f32 output: accumulate in f32 VMEM scratch, cast once at the end."""
    k = pl.program_id(1)

    @pl.when(k == 0)
    def _():
        # Fold b2 into the accumulator init (removes the epilogue add).
        acc_ref[...] = jnp.broadcast_to(
            b2_ref[...].astype(jnp.float32), acc_ref.shape)

    acc_ref[...] += _fc1_gelu_fc2(x_ref, w1_ref, b1_ref, w2_ref, approximate)

    @pl.when(k == pl.num_programs(1) - 1)
    def _():
        o_ref[...] = acc_ref[...].astype(o_ref.dtype)


def _ffn_kernel_f32out(x_ref, w1_ref, b1_ref, w2_ref, b2_ref, o_ref, *,
                       approximate):
    """f32 output: accumulate directly into the resident output block."""
    k = pl.program_id(1)

    @pl.when(k == 0)
    def _():
        o_ref[...] = jnp.broadcast_to(
            b2_ref[...].astype(jnp.float32), o_ref.shape)

    o_ref[...] += _fc1_gelu_fc2(x_ref, w1_ref, b1_ref, w2_ref, approximate)


def _round_up(x, m):
    return ((x + m - 1) // m) * m


def _pick_tile_h(d_hid, cap):
    """Largest multiple-of-128 divisor of d_hid that is <= cap, else full dim.

    Full dim satisfies the (8,128) BlockSpec rule for any size; divisors that
    are multiples of 128 keep the lane dim aligned without masking.
    """
    if d_hid <= cap:
        return d_hid
    d = (cap // 128) * 128
    while d >= 128:
        if d_hid % d == 0:
            return d
        d -= 128
    # TODO(synk): masked tail chunk for pathological hidden dims with no
    # multiple-of-128 divisor; falling back to the full slab here.
    return d_hid


def _chip_config():
    kind = ""
    try:
        kind = jax.devices()[0].device_kind.lower()
    except Exception:
        pass
    if "v7" in kind:
        # 64 MiB VMEM / TC, 2 TCs: trade tile_h down so tile_m clears the
        # ~640-row roofline crossover without VMEM OOM.
        return dict(tile_m=768, tile_h=256, vmem_cap=56 << 20, cores=2)
    if "v6" in kind:
        # 128 MiB VMEM: large token tile (crossover ~680 rows, bf16 weights).
        return dict(tile_m=1024, tile_h=512, vmem_cap=104 << 20, cores=1)
    if "v5" in kind:
        # Lower MXU peak -> crossover ~240 rows; 512 gives comfortable margin.
        return dict(tile_m=512, tile_h=512, vmem_cap=104 << 20, cores=1)
    # Unknown part: conservative 64 MiB-class assumptions.
    return dict(tile_m=768, tile_h=256, vmem_cap=56 << 20, cores=2)


@functools.partial(
    jax.jit,
    static_argnames=("tile_m", "tile_h", "vmem_cap", "cores", "approximate_gelu"),
)
def _feed_forward_impl(x, w1, b1, w2, b2, *, tile_m, tile_h, vmem_cap, cores,
                       approximate_gelu):
    B, S, D_in = x.shape
    D_hid = w1.shape[1]
    D_out = w2.shape[1]
    out_dtype = x.dtype

    tokens = B * S
    x2d = x.reshape(tokens, D_in)
    # Biases kept 2-D for TPU-friendly (sublane, lane) layout.
    b1_2d = b1.reshape(1, D_hid)
    b2_2d = b2.reshape(1, D_out)

    # ---- Tile selection -----------------------------------------------------
    tile_m_eff = min(tile_m, _round_up(tokens, 8))
    tile_h_eff = _pick_tile_h(D_hid, tile_h)

    # Megacore balance (v7x): keep the token-tile count a multiple of the core
    # count when that does not push a tile below the roofline crossover.
    n_tiles = pl.cdiv(tokens, tile_m_eff)
    if cores > 1 and n_tiles > 1 and n_tiles % cores != 0:
        cand = _round_up(pl.cdiv(tokens, _round_up(n_tiles, cores)), 8)
        if cand >= 512:
            tile_m_eff = cand

    # ---- VMEM budget (double-buffered streaming tiles + f32 accumulator) ----
    use_scratch = out_dtype != jnp.float32

    def vmem_bytes(tm, th):
        b = 2 * (
            tm * D_in * x.dtype.itemsize
            + D_in * th * w1.dtype.itemsize
            + th * D_out * w2.dtype.itemsize
            + tm * D_out * out_dtype.itemsize
            + th * b1.dtype.itemsize
            + D_out * b2.dtype.itemsize
        )
        if use_scratch:
            b += tm * D_out * 4
        return b

    while vmem_bytes(tile_m_eff, tile_h_eff) > vmem_cap and tile_m_eff > 128:
        tile_m_eff = max(128, _round_up(tile_m_eff // 2, 8))

    grid = (pl.cdiv(tokens, tile_m_eff), D_hid // tile_h_eff)

    # Advisory cost estimate for the XLA scheduler.
    flops = 2 * tokens * (D_in * D_hid + D_hid * D_out)
    bytes_accessed = (
        x2d.size * x2d.dtype.itemsize
        + w1.size * w1.dtype.itemsize
        + b1.size * b1.dtype.itemsize
        + w2.size * w2.dtype.itemsize
        + b2.size * b2.dtype.itemsize
        + tokens * D_out * out_dtype.itemsize
    )
    cost = pl.CostEstimate(
        flops=flops, transcendentals=tokens * D_hid, bytes_accessed=bytes_accessed
    )

    vmem_limit = int(
        min(max(vmem_bytes(tile_m_eff, tile_h_eff) + (4 << 20), 32 << 20), vmem_cap)
    )

    if use_scratch:
        kernel = functools.partial(_ffn_kernel_acc, approximate=approximate_gelu)
        scratch = [pltpu.VMEM((tile_m_eff, D_out), jnp.float32)]
    else:
        kernel = functools.partial(_ffn_kernel_f32out, approximate=approximate_gelu)
        scratch = []  # accumulate directly into the f32 output block

    out2d = pl.pallas_call(
        kernel,
        out_shape=jax.ShapeDtypeStruct((tokens, D_out), out_dtype),
        grid_spec=pltpu.PrefetchScalarGridSpec(
            num_scalar_prefetch=0,
            grid=grid,
            in_specs=[
                # x tile: same block for every hidden step (stays resident).
                pl.BlockSpec((tile_m_eff, D_in), lambda i, k: (i, 0)),
                # W1 column slab for hidden chunk k.
                pl.BlockSpec((D_in, tile_h_eff), lambda i, k: (0, k)),
                # b1 chunk k.
                pl.BlockSpec((1, tile_h_eff), lambda i, k: (0, k)),
                # W2 row slab for hidden chunk k.
                pl.BlockSpec((tile_h_eff, D_out), lambda i, k: (k, 0)),
                # b2 (tiny, constant).
                pl.BlockSpec((1, D_out), lambda i, k: (0, 0)),
            ],
            out_specs=pl.BlockSpec((tile_m_eff, D_out), lambda i, k: (i, 0)),
            scratch_shapes=scratch,
        ),
        compiler_params=pltpu.CompilerParams(
            dimension_semantics=("parallel", "arbitrary"),
            vmem_limit_bytes=vmem_limit,
        ),
        cost_estimate=cost,
    )(x2d, w1, b1_2d, w2, b2_2d)

    return out2d.reshape(B, S, D_out)


def feed_forward(x, w1, b1, w2, b2, *, tile_m=None, tile_h=None,
                 approximate_gelu=False):
    """x: (batch, seq, in_features) -> (batch, seq, out_features).

    Weights are stored as (in, out) == transpose of the PyTorch nn.Linear
    weight, so the kernel computes x @ W + b.  For production, pass x/W1/W2
    as bf16 (cast weights once outside this call, not per step).
    """
    cfg = _chip_config()
    return _feed_forward_impl(
        x, w1, b1, w2, b2,
        tile_m=int(tile_m or cfg["tile_m"]),
        tile_h=int(tile_h or cfg["tile_h"]),
        vmem_cap=int(cfg["vmem_cap"]),
        cores=int(cfg["cores"]),
        approximate_gelu=bool(approximate_gelu),
    )


def _reference(x, w1, b1, w2, b2):
    h = jnp.einsum("bsd,dh->bsh", x, w1) + b1
    h = 0.5 * h * (1.0 + jax.lax.erf(h / jnp.sqrt(2.0)))
    return jnp.einsum("bsh,ho->bso", h, w2) + b2


if __name__ == "__main__":
    # Small shapes consistent with the module's forward:
    #   FeedForward(in_features=32, hidden_features=64) applied to (B, S, D).
    # NOTE: D_out=32 (<128) is lane-sparse and fine for this test; production
    # dims should keep the output feature dim a multiple of 128.
    B, S = 2, 8
    in_features = 32
    hidden_features = 64
    out_features = in_features  # out_features defaults to in_features

    key = jax.random.PRNGKey(0)
    kx, k1, kb1, k2, kb2 = jax.random.split(key, 5)

    x = jax.random.normal(kx, (B, S, in_features), dtype=jnp.float32)

    # Deterministic parameter init (weights stored as (in, out), i.e. W^T of
    # the PyTorch nn.Linear weight, so the kernel does x @ W + b).
    w1 = jax.random.normal(k1, (in_features, hidden_features), jnp.float32) * 0.05
    b1 = jax.random.normal(kb1, (hidden_features,), jnp.float32) * 0.05
    w2 = jax.random.normal(k2, (hidden_features, out_features), jnp.float32) * 0.05
    b2 = jax.random.normal(kb2, (out_features,), jnp.float32) * 0.05

    y = feed_forward(x, w1, b1, w2, b2)
    y = jax.block_until_ready(y)

    y_ref = _reference(x, w1, b1, w2, b2)
    assert y.shape == (B, S, out_features)
    assert jnp.allclose(y, y_ref, atol=1e-5, rtol=1e-5), "mismatch vs reference"

    print("KERNEL_OK")
</pallas_src>

<mosaic_0001>
module attributes {stable_mosaic.version = 11 : i64} {
  func.func @_ffn_kernel_f32out(%arg0: i32, %arg1: i32, %arg2: memref<16x32xf32, #tpu.memory_space<vmem>>, %arg3: memref<32x64xf32, #tpu.memory_space<vmem>>, %arg4: memref<1x64xf32, #tpu.memory_space<vmem>>, %arg5: memref<64x32xf32, #tpu.memory_space<vmem>>, %arg6: memref<1x32xf32, #tpu.memory_space<vmem>>, %arg7: memref<16x32xf32, #tpu.memory_space<vmem>>) attributes {dimension_semantics = [#tpu.dimension_semantics<parallel>, #tpu.dimension_semantics<arbitrary>], iteration_bounds = array<i64: 1, 1>, scalar_prefetch = 0 : i64, scratch_operands = 0 : i64, tpu.core_type = #tpu.core_type<tc>, window_params = [{transform_indices = @transform_0, window_bounds = array<i64: 16, 32>}, {transform_indices = @transform_1, window_bounds = array<i64: 32, 64>}, {transform_indices = @transform_2, window_bounds = array<i64: 1, 64>}, {transform_indices = @transform_3, window_bounds = array<i64: 64, 32>}, {pipeline_mode = #tpu.pipeline_mode<synchronous>, transform_indices = @transform_4, window_bounds = array<i64: 1, 32>}, {transform_indices = @transform_5, window_bounds = array<i64: 16, 32>}]} {
    %c0_i32 = arith.constant 0 : i32
    %0 = arith.cmpi eq, %arg1, %c0_i32 : i32
    %1 = arith.extui %0 : i1 to i32
    %c0_i32_0 = arith.constant 0 : i32
    %2 = arith.cmpi ne, %1, %c0_i32_0 : i32
    scf.if %2 {
      %c0_16 = arith.constant 0 : index
      %c0_17 = arith.constant 0 : index
      %22 = vector.load %arg6[%c0_16, %c0_17] : memref<1x32xf32, #tpu.memory_space<vmem>>, vector<1x32xf32>
      %23 = vector.shape_cast %22 : vector<1x32xf32> to vector<1x32xf32>
      %24 = vector.broadcast %23 : vector<1x32xf32> to vector<16x32xf32>
      %c0_18 = arith.constant 0 : index
      %c0_19 = arith.constant 0 : index
      %25 = vector.load %arg7[%c0_18, %c0_19] : memref<16x32xf32, #tpu.memory_space<vmem>>, vector<16x32xf32>
      tpu.vector_store %arg7[%c0_18, %c0_19], %24 {strides = array<i32>} : memref<16x32xf32, #tpu.memory_space<vmem>>, vector<16x32xf32>,
    } else {
    }
    %c0 = arith.constant 0 : index
    %c0_1 = arith.constant 0 : index
    %3 = vector.load %arg7[%c0, %c0_1] : memref<16x32xf32, #tpu.memory_space<vmem>>, vector<16x32xf32>
    %c0_2 = arith.constant 0 : index
    %c0_3 = arith.constant 0 : index
    %4 = vector.load %arg2[%c0_2, %c0_3] : memref<16x32xf32, #tpu.memory_space<vmem>>, vector<16x32xf32>
    %c0_4 = arith.constant 0 : index
    %c0_5 = arith.constant 0 : index
    %5 = vector.load %arg3[%c0_4, %c0_5] : memref<32x64xf32, #tpu.memory_space<vmem>>, vector<32x64xf32>
    %cst = arith.constant dense<0.000000e+00> : vector<16x64xf32>
    %6 = tpu.matmul %4, %5, %cst {dimension_numbers = #tpu.dot_dimension_numbers<[1], [0], [0], [1], [0, 0, 1, 1], [], []>} : vector<16x32xf32>, vector<32x64xf32>, vector<16x64xf32> -> vector<16x64xf32>
    %c0_6 = arith.constant 0 : index
    %c0_7 = arith.constant 0 : index
    %7 = vector.load %arg4[%c0_6, %c0_7] : memref<1x64xf32, #tpu.memory_space<vmem>>, vector<1x64xf32>
    %8 = vector.broadcast %7 : vector<1x64xf32> to vector<16x64xf32>
    %9 = arith.addf %6, %8 : vector<16x64xf32>
    %cst_8 = arith.constant 5.000000e-01 : f32
    %10 = vector.broadcast %cst_8 : f32 to vector<16x64xf32>
    %11 = arith.mulf %10, %9 : vector<16x64xf32>
    %cst_9 = arith.constant 0.707106769 : f32
    %12 = vector.broadcast %cst_9 : f32 to vector<16x64xf32>
    %13 = arith.mulf %9, %12 : vector<16x64xf32>
    %14 = math.erf %13 : vector<16x64xf32>
    %cst_10 = arith.constant 1.000000e+00 : f32
    %15 = vector.broadcast %cst_10 : f32 to vector<16x64xf32>
    %16 = arith.addf %15, %14 : vector<16x64xf32>
    %17 = arith.mulf %11, %16 : vector<16x64xf32>
    %c0_11 = arith.constant 0 : index
    %c0_12 = arith.constant 0 : index
    %18 = vector.load %arg5[%c0_11, %c0_12] : memref<64x32xf32, #tpu.memory_space<vmem>>, vector<64x32xf32>
    %cst_13 = arith.constant dense<0.000000e+00> : vector<16x32xf32>
    %19 = tpu.matmul %17, %18, %cst_13 {dimension_numbers = #tpu.dot_dimension_numbers<[1], [0], [0], [1], [0, 0, 1, 1], [], []>} : vector<16x64xf32>, vector<64x32xf32>, vector<16x32xf32> -> vector<16x32xf32>
    %20 = arith.addf %3, %19 : vector<16x32xf32>
    %c0_14 = arith.constant 0 : index
    %c0_15 = arith.constant 0 : index
    %21 = vector.load %arg7[%c0_14, %c0_15] : memref<16x32xf32, #tpu.memory_space<vmem>>, vector<16x32xf32>
    tpu.vector_store %arg7[%c0_14, %c0_15], %20 {strides = array<i32>} : memref<16x32xf32, #tpu.memory_space<vmem>>, vector<16x32xf32>,
    return
  }
  func.func @transform_0(%arg0: i32, %arg1: i32) -> (i32, i32) {
    %c0_i32 = arith.constant 0 : i32
    %c0_i32_0 = arith.constant 0 : i32
    return %arg0, %c0_i32 : i32, i32
  }
  func.func @transform_1(%arg0: i32, %arg1: i32) -> (i32, i32) {
    %c0_i32 = arith.constant 0 : i32
    %c0_i32_0 = arith.constant 0 : i32
    return %c0_i32, %arg1 : i32, i32
  }
  func.func @transform_2(%arg0: i32, %arg1: i32) -> (i32, i32) {
    %c0_i32 = arith.constant 0 : i32
    %c0_i32_0 = arith.constant 0 : i32
    return %c0_i32, %arg1 : i32, i32
  }
  func.func @transform_3(%arg0: i32, %arg1: i32) -> (i32, i32) {
    %c0_i32 = arith.constant 0 : i32
    %c0_i32_0 = arith.constant 0 : i32
    return %arg1, %c0_i32 : i32, i32
  }
  func.func @transform_4(%arg0: i32, %arg1: i32) -> (i32, i32) {
    %c0_i32 = arith.constant 0 : i32
    %c0_i32_0 = arith.constant 0 : i32
    %c0_i32_1 = arith.constant 0 : i32
    return %c0_i32, %c0_i32_0 : i32, i32
  }
  func.func @transform_5(%arg0: i32, %arg1: i32) -> (i32, i32) {
    %c0_i32 = arith.constant 0 : i32
    %c0_i32_0 = arith.constant 0 : i32
    return %arg0, %c0_i32 : i32, i32
  }
}

</mosaic_0001>

<llo_original>
// kernel: _feed_forward_impl.1
$region0: #{_feed_forward_impl.1}
  #allocation0 [shape = 'u32[]', space=smem, size = 0x4, offset = 0x4, fixed_abs, tag = 'smem constant byte address 0x4 - core index']
  #allocation1 [shape = 'u32[144,128]{1,0:T(1,128)}', space=vmem, size = 0x12000, scoped, tag = 'internal scratch']
  %s0 = inlined_call_operand.vmem [shape: f32[16,32], index: 0, kind: input, shape index: {}]
  %s1 = inlined_call_operand.vmem [shape: f32[32,64], index: 1, kind: input, shape index: {}]
  %s2 = inlined_call_operand.vmem [shape: f32[1,64], index: 2, kind: input, shape index: {}]
  %s3 = inlined_call_operand.vmem [shape: f32[64,32], index: 3, kind: input, shape index: {}]
  %s4 = inlined_call_operand.vmem [shape: f32[1,32], index: 4, kind: input, shape index: {}]
  %s5 = inlined_call_operand.hbm [shape: f32[16,32], index: 5, kind: output, shape index: {}]
  %s6 = sld [smem:[#allocation0]]
  $region34: #{_feed_forward_impl.1} parent=0
    _
  %s8 = ssub.s32 1, %s6
  %s9 = scalar_select 0, %s8, %s6
  $region1: #{_feed_forward_impl.1} parent=0
    #allocation2 [shape = 'u8[8192]{0}', space=vmem, size = 0x2000, scoped, tag = 'output window, operand 0, single buffered']
    #allocation3 [shape = 's32[1]{0}', space=sflag, size = 0x4, scoped, tag = 'scoped memory for _feed_forward_impl.1']
    %10 = vsyncpa [#allocation3], 0
    // Predicated region
    $region2: #{_feed_forward_impl.1} parent=1 // pred_check
      _
    $region3: #{_feed_forward_impl.1} parent=1 // pred_check_branch
      %12 = sbr.rel (0) target = $region5
    $region4: #{_feed_forward_impl.1} parent=1 // pred_region
      _
    $region5: #{_feed_forward_impl.1} parent=1 // pred_fallthru
      _
    // Predicated region
    $region6: #{_feed_forward_impl.1} parent=1 // pred_check
      _
    $region7: #{_feed_forward_impl.1} parent=1 // pred_check_branch
      %14 = sbr.rel (0) target = $region9
    $region8: #{_feed_forward_impl.1} parent=1 // pred_region
      _
    $region9: #{_feed_forward_impl.1} parent=1 // pred_fallthru
      _
    // Predicated region
    $region10: #{_feed_forward_impl.1} parent=1 // pred_check
      _
    $region11: #{_feed_forward_impl.1} parent=1 // pred_check_branch
      %16 = sbr.rel (0) target = $region13
    $region12: #{_feed_forward_impl.1} parent=1 // pred_region
      _
    $region13: #{_feed_forward_impl.1} parent=1 // pred_fallthru
      _
    // Predicated region
    $region14: #{_feed_forward_impl.1} parent=1 // pred_check
      _
    $region15: #{_feed_forward_impl.1} parent=1 // pred_check_branch
      %18 = sbr.rel (0) target = $region17
    $region16: #{_feed_forward_impl.1} parent=1 // pred_region
      _
    $region17: #{_feed_forward_impl.1} parent=1 // pred_fallthru
      _
    // Predicated region
    $region18: #{_feed_forward_impl.1} parent=1 // pred_check
      _
    $region19: #{_feed_forward_impl.1} parent=1 // pred_check_branch
      %20 = sbr.rel (0) target = $region21
    $region20: #{_feed_forward_impl.1} parent=1 // pred_region
      _
    $region21: #{_feed_forward_impl.1} parent=1 // pred_fallthru
      _
    %p21 = scmp.eq.s32.totalorder 0, 0
    // Predicated region
    $region22: #{_feed_forward_impl.1} parent=1 // pred_check
      %p22 = pneg %p21
    $region23: #{_feed_forward_impl.1} parent=1 // pred_check_branch
      %24 = sbr.rel (%p22) target = $region25
    $region24: #{_feed_forward_impl.1} parent=1 // pred_region
      %v25 = vld [vmem:[%s4] sm:$0x1]
      %v27 = vlaneseq
      %v28 = vshrl.u32 %v27, 7
      %v29 = vsub.s32 0, %v28
      %v30 = vrot.slane %v25, %v29
      %vm32 = vcmask 261120
      %33 = vst.msk [vmem:[#allocation2] sm:$0xff] %vm32, %v30
      %34 = vst.msk [vmem:[#allocation2 + $0x8] sm:$0xff] %vm32, %v30
    $region25: #{_feed_forward_impl.1} parent=1 // pred_fallthru
      _
    %v35 = vld [vmem:[#allocation2] sm:$0xff]
    %v36 = vld [vmem:[#allocation2 + $0x8] sm:$0xff]
    %v37 = vld [vmem:[%s0] sm:$0xff]
    %v38 = vld [vmem:[%s0 + $0x8] sm:$0xff]
    %v39 = vld [vmem:[%s1] sm:$0xff]
    %v40 = vld [vmem:[%s1 + $0x8] sm:$0xff]
    %v41 = vld [vmem:[%s1 + $0x10] sm:$0xff]
    %v42 = vld [vmem:[%s1 + $0x18] sm:$0xff]
    %v43 = vld [vmem:[%s2] sm:$0x1]
    %v45 = vlaneseq
    %v46 = vshrl.u32 %v45, 7
    %v47 = vsub.s32 0, %v46
    %v48 = vrot.slane %v43, %v47
    %vm50 = vcmask 261120
    %v52 = vsel %vm50, %v37, 0
    %v55 = vsel %vm50, %v38, 0
    %57 = vmatprep.subr.mxu0 0.0
    %58 = vmatpush1.msra.mxu0 %v39
    %59 = vmatprep.subr.mxu0 0.0
    %60 = vmatpush1.msra.mxu0 %v40
    %61 = vmatprep.subr.mxu0 0.0
    %62 = vmatpush1.msra.mxu0 %v41
    %63 = vmatprep.subr.mxu0 0.0
    %64 = vmatpush1.msra.mxu0 %v42
    %65 = vmatprep.subr.mxu0 0.0
    %66 = vmatpush1.msra.mxu0 0.0
    %67 = vmatprep.subr.mxu0 0.0
    %68 = vmatpush1.msra.mxu0 0.0
    %69 = vmatprep.subr.mxu0 0.0
    %70 = vmatpush1.msra.mxu0 0.0
    %71 = vmatprep.subr.mxu0 0.0
    %72 = vmatpush1.msra.mxu0 0.0
    %73 = vmatprep.subr.mxu0 0.0
    %74 = vmatpush1.msra.mxu0 0.0
    %75 = vmatprep.subr.mxu0 0.0
    %76 = vmatpush1.msra.mxu0 0.0
    %77 = vmatprep.subr.mxu0 0.0
    %78 = vmatpush1.msra.mxu0 0.0
    %79 = vmatprep.subr.mxu0 0.0
    %80 = vmatpush1.msra.mxu0 0.0
    %81 = vmatprep.subr.mxu0 0.0
    %82 = vmatpush1.msra.mxu0 0.0
    %83 = vmatprep.subr.mxu0 0.0
    %84 = vmatpush1.msra.mxu0 0.0
    %85 = vmatprep.subr.mxu0 0.0
    %86 = vmatpush1.msra.mxu0 0.0
    %87 = vmatprep.subr.mxu0 0.0
    %88 = vmatpush1.msra.mxu0 0.0
    %89 = vmatprep.subr.mxu0 0.0
    %90 = vmatpush1.msra.mxu0 0.0
    %91 = vmatprep.subr.mxu0 0.0
    %92 = vmatpush1.msra.mxu0 0.0
    %93 = vmatprep.subr.mxu0 0.0
    %94 = vmatpush1.msra.mxu0 0.0
    %95 = vmatprep.subr.mxu0 0.0
    %96 = vmatpush1.msra.mxu0 0.0
    %97 = vmatprep.subr.mxu0 0.0
    %98 = vmatpush1.msra.mxu0 0.0
    %99 = vmatprep.subr.mxu0 0.0
    %100 = vmatpush1.msra.mxu0 0.0
    %101 = vmatprep.subr.mxu0 0.0
    %102 = vmatpush1.msra.mxu0 0.0
    %103 = vmatprep.subr.mxu0 0.0
    %104 = vmatpush1.msra.mxu0 0.0
    %105 = vmatprep.subr.mxu0 0.0
    %106 = vmatpush1.msra.mxu0 0.0
    %107 = vmatprep.subr.mxu0 0.0
    %108 = vmatpush1.msra.mxu0 0.0
    %109 = vmatprep.subr.mxu0 0.0
    %110 = vmatpush1.msra.mxu0 0.0
    %111 = vmatprep.subr.mxu0 0.0
    %112 = vmatpush1.msra.mxu0 0.0
    %113 = vmatprep.subr.mxu0 0.0
    %114 = vmatpush1.msra.mxu0 0.0
    %115 = vmatprep.subr.mxu0 0.0
    %116 = vmatpush1.msra.mxu0 0.0
    %117 = vmatprep.subr.mxu0 0.0
    %118 = vmatpush1.msra.mxu0 0.0
    %119 = vmatprep.subr.mxu0 0.0
    %120 = vmatpush1.msra.mxu0 0.0
    %121 = vmatprep.mubr.f32.mxu0 0.0
    %122 = vmatmul.mubr.f32.gmra.mrb[0].mxu0 %v52
    %v123 = vpop.f32.mrb[0].mxu0
    %v124 = vadd.f32 %v48, %v123
    %v125 = vpop.f32.mrb[0].mxu0
    %126 = vmatprep.mubr.f32.mxu0 0.0
    %127 = vmatmul.mubr.f32.gmra.mrb[0].mxu0 %v55
    %v128 = vpop.f32.mrb[0].mxu0
    %v129 = vadd.f32 %v48, %v128
    %v130 = vpop.f32.mrb[0].mxu0
    %131 = vdwg.mxu0
    %v132 = vmul.f32 %v124, 0.5
    %v133 = vmul.f32 %v129, 0.5
    %v134 = vmul.f32 %v124, 0.70710677
    %v135 = vmul.f32 %v129, 0.70710677
    %v136 = verf.f32.pop %v134
    %v137 = verf.f32.pop %v135
    %v138 = vadd.f32 %v136, 1.0
    %v139 = vadd.f32 %v137, 1.0
    %v140 = vmul.f32 %v132, %v138
    %v141 = vmul.f32 %v133, %v139
    %v142 = vld [vmem:[%s3] sm:$0xff]
    %v143 = vld [vmem:[%s3 + $0x8] sm:$0xff]
    %v144 = vld [vmem:[%s3 + $0x10] sm:$0xff]
    %v145 = vld [vmem:[%s3 + $0x18] sm:$0xff]
    %v146 = vld [vmem:[%s3 + $0x20] sm:$0xff]
    %v147 = vld [vmem:[%s3 + $0x28] sm:$0xff]
    %v148 = vld [vmem:[%s3 + $0x30] sm:$0xff]
    %v149 = vld [vmem:[%s3 + $0x38] sm:$0xff]
    %vm150 = vcmask 523264
    %v152 = vsel %vm150, %v140, 0
    %v155 = vsel %vm150, %v141, 0
    %157 = vmatprep.subr.mxu0 0.0
    %158 = vmatpush1.msra.mxu0 %v142
    %159 = vmatprep.subr.mxu0 0.0
    %160 = vmatpush1.msra.mxu0 %v143
    %161 = vmatprep.subr.mxu0 0.0
    %162 = vmatpush1.msra.mxu0 %v144
    %163 = vmatprep.subr.mxu0 0.0
    %164 = vmatpush1.msra.mxu0 %v145
    %165 = vmatprep.subr.mxu0 0.0
    %166 = vmatpush1.msra.mxu0 %v146
    %167 = vmatprep.subr.mxu0 0.0
    %168 = vmatpush1.msra.mxu0 %v147
    %169 = vmatprep.subr.mxu0 0.0
    %170 = vmatpush1.msra.mxu0 %v148
    %171 = vmatprep.subr.mxu0 0.0
    %172 = vmatpush1.msra.mxu0 %v149
    %173 = vmatprep.subr.mxu0 0.0
    %174 = vmatpush1.msra.mxu0 0.0
    %175 = vmatprep.subr.mxu0 0.0
    %176 = vmatpush1.msra.mxu0 0.0
    %177 = vmatprep.subr.mxu0 0.0
    %178 = vmatpush1.msra.mxu0 0.0
    %179 = vmatprep.subr.mxu0 0.0
    %180 = vmatpush1.msra.mxu0 0.0
    %181 = vmatprep.subr.mxu0 0.0
    %182 = vmatpush1.msra.mxu0 0.0
    %183 = vmatprep.subr.mxu0 0.0
    %184 = vmatpush1.msra.mxu0 0.0
    %185 = vmatprep.subr.mxu0 0.0
    %186 = vmatpush1.msra.mxu0 0.0
    %187 = vmatprep.subr.mxu0 0.0
    %188 = vmatpush1.msra.mxu0 0.0
    %189 = vmatprep.subr.mxu0 0.0
    %190 = vmatpush1.msra.mxu0 0.0
    %191 = vmatprep.subr.mxu0 0.0
    %192 = vmatpush1.msra.mxu0 0.0
    %193 = vmatprep.subr.mxu0 0.0
    %194 = vmatpush1.msra.mxu0 0.0
    %195 = vmatprep.subr.mxu0 0.0
    %196 = vmatpush1.msra.mxu0 0.0
    %197 = vmatprep.subr.mxu0 0.0
    %198 = vmatpush1.msra.mxu0 0.0
    %199 = vmatprep.subr.mxu0 0.0
    %200 = vmatpush1.msra.mxu0 0.0
    %201 = vmatprep.subr.mxu0 0.0
    %202 = vmatpush1.msra.mxu0 0.0
    %203 = vmatprep.subr.mxu0 0.0
    %204 = vmatpush1.msra.mxu0 0.0
    %205 = vmatprep.subr.mxu0 0.0
    %206 = vmatpush1.msra.mxu0 0.0
    %207 = vmatprep.subr.mxu0 0.0
    %208 = vmatpush1.msra.mxu0 0.0
    %209 = vmatprep.subr.mxu0 0.0
    %210 = vmatpush1.msra.mxu0 0.0
    %211 = vmatprep.subr.mxu0 0.0
    %212 = vmatpush1.msra.mxu0 0.0
    %213 = vmatprep.subr.mxu0 0.0
    %214 = vmatpush1.msra.mxu0 0.0
    %215 = vmatprep.subr.mxu0 0.0
    %216 = vmatpush1.msra.mxu0 0.0
    %217 = vmatprep.subr.mxu0 0.0
    %218 = vmatpush1.msra.mxu0 0.0
    %219 = vmatprep.subr.mxu0 0.0
    %220 = vmatpush1.msra.mxu0 0.0
    %221 = vmatprep.mubr.f32.mxu0 0.0
    %222 = vmatmul.mubr.f32.gmra.mrb[0].mxu0 %v152
    %v223 = vpop.f32.mrb[0].mxu0
    %v224 = vadd.f32 0.0, %v223
    %v225 = vpop.f32.mrb[0].mxu0
    %226 = vmatprep.mubr.f32.mxu0 0.0
    %227 = vmatmul.mubr.f32.gmra.mrb[0].mxu0 %v155
    %v228 = vpop.f32.mrb[0].mxu0
    %v229 = vadd.f32 0.0, %v228
    %v230 = vpop.f32.mrb[0].mxu0
    %231 = vdwg.mxu0
    %v232 = vadd.f32 %v35, %v224
    %v233 = vadd.f32 %v36, %v229
    %234 = vst.msk [vmem:[#allocation2] sm:$0xff] %vm50, %v232
    %235 = vst.msk [vmem:[#allocation2 + $0x8] sm:$0xff] %vm50, %v233
    // Predicated region
    $region26: #{_feed_forward_impl.1} parent=1 // pred_check
      _
    $region27: #{_feed_forward_impl.1} parent=1 // pred_check_branch
      %237 = sbr.rel (0) target = $region29
    $region28: #{_feed_forward_impl.1} parent=1 // pred_region
      %s239 = ssub.s32 256, 256
      %240 = vsyncadd [#allocation3], %s239
      %s241 = sshll.u32 [#allocation2], 4
      %s242 = int_to_ptr.vmem [resolvable:$true] %s241
      %247 = dma.vmem_to_hbm [thread:$0]  %s242, 256, %s5, [#allocation3], 128, 128, 8
    $region29: #{_feed_forward_impl.1} parent=1 // pred_fallthru
      _
    // Predicated region
    $region30: #{_feed_forward_impl.1} parent=1 // pred_check
      _
    $region31: #{_feed_forward_impl.1} parent=1 // pred_check_branch
      %249 = sbr.rel (0) target = $region33
    $region32: #{_feed_forward_impl.1} parent=1 // pred_region
      %250 = dma.done [#allocation3], 256
    $region33: #{_feed_forward_impl.1} parent=1 // pred_fallthru
      _
    %251 = vsyncpa [#allocation3], 1

</llo_original>
